<compile_context>
chip_gen: v7x
topology: tpu7x:2x2x1
jax: 0.10.0
libtpu: 0.0.40
codegen_flags: <defaults>
</compile_context>

<pallas_src>
import functools

import jax
import jax.numpy as jnp
from jax.experimental import pallas as pl
from jax.experimental.pallas import tpu as pltpu

N_INPUT = 40
N_H1 = 30
N_H2 = 10
N_OUT = 1

# Packed small-parameter vector (one VMEM-resident operand instead of four
# width-1 blocks). Offsets are sublane(8)-aligned.
_B1_OFF = 0            # rows [0, 30)   : b1
_B2_OFF = 32           # rows [32, 42)  : b2
_W3_OFF = 48           # rows [48, 58)  : w3 (as a column)
_B3_OFF = 64           # row  [64]      : b3
_PVEC_ROWS = 72


def _round_up(x, m):
    return (x + m - 1) // m * m


@functools.lru_cache(maxsize=None)
def _default_tuning():
    """Per-generation (tile cap, vmem_limit_bytes)."""
    try:
        vmem = int(pltpu.get_tpu_info().vmem_capacity_bytes)
    except Exception:
        vmem = 64 << 20                      # be conservative (v7x per-TC VMEM)
    if vmem >= (100 << 20):                  # v5e / v6e: 128 MiB physical VMEM
        return 32768, 64 << 20
    return 16384, 32 << 20                   # v7x: 64 MiB physical VMEM per TC


def _choose_tile(batch, max_tile):
    """Lane-aligned batch tile; >=2 balanced grid steps when batch is large."""
    if batch <= 128:
        return batch                          # single full-array block
    tb = _round_up(pl.cdiv(batch, 2), 128)    # split work across 2 TCs (v7x)
    return min(max_tile, tb)


def clf_kernel(x_ref, w1_ref, w2_ref, pvec_ref, o_ref):
    x = x_ref[...]                                    # (TB, 40), batch on sublanes

    # layer_1 + ReLU: contract the 40-dim minormost axis of both operands
    # ((30,40) x (TB,40) -> (30, TB)); batch lands on lanes, no separate
    # transpose pass needed.
    h1 = jax.lax.dot_general(
        w1_ref[...], x, (((1,), (1,)), ((), ())),
        preferred_element_type=jnp.float32)
    b1 = pvec_ref[_B1_OFF:_B1_OFF + N_H1, :]          # (30, 1), lane-broadcast
    h1 = jnp.maximum(h1 + b1, 0.0)

    # layer_2 + ReLU: (10,30) @ (30,TB) -> (10,TB), f32 accumulate.
    h2 = jnp.dot(w2_ref[...], h1.astype(w2_ref.dtype),
                 preferred_element_type=jnp.float32)
    b2 = pvec_ref[_B2_OFF:_B2_OFF + N_H2, :]          # (10, 1)
    h2 = jnp.maximum(h2 + b2, 0.0)

    # dropout(p=0.1): identity in eval/prediction mode.
    # TODO(synk): training-mode dropout (pltpu.prng_*) not implemented.

    # layer_out + Sigmoid: 10 -> 1 contraction on VPU/XLU (avoids a degenerate
    # 1-output-row MXU matmul); lane-dense (1, TB) store.
    w3 = pvec_ref[_W3_OFF:_W3_OFF + N_H2, :]          # (10, 1)
    b3 = pvec_ref[_B3_OFF:_B3_OFF + 1, :]             # (1, 1)
    z = jnp.sum(w3 * h2, axis=0, keepdims=True) + b3  # (1, TB)
    o_ref[...] = jax.nn.sigmoid(z).astype(o_ref.dtype)


def prepare_params(params, dtype=jnp.float32):
    """One-time conversion of PyTorch-convention params to kernel layout.

    `dtype` controls the weight/activation stream for the MXU (use bf16 to
    halve HBM traffic); biases / w3 / all post-matmul math stay f32.
    """
    pvec = jnp.zeros((_PVEC_ROWS, 1), jnp.float32)
    pvec = pvec.at[_B1_OFF:_B1_OFF + N_H1, 0].set(params["b1"].astype(jnp.float32))
    pvec = pvec.at[_B2_OFF:_B2_OFF + N_H2, 0].set(params["b2"].astype(jnp.float32))
    pvec = pvec.at[_W3_OFF:_W3_OFF + N_H2, 0].set(
        params["w3"].reshape(N_H2).astype(jnp.float32))
    pvec = pvec.at[_B3_OFF, 0].set(params["b3"].reshape(()).astype(jnp.float32))
    return (
        params["w1"].astype(dtype),   # (30, 40)
        params["w2"].astype(dtype),   # (10, 30)
        pvec,                         # (72, 1) f32: b1 | b2 | w3 | b3
    )


@functools.partial(jax.jit, static_argnums=(2, 3))
def _clf_forward(x, prepared, max_tile, vmem_limit_bytes):
    w1, w2, pvec = prepared
    batch = x.shape[0]
    assert x.shape[1] == N_INPUT, x.shape

    tb = _choose_tile(batch, max_tile)
    grid = (pl.cdiv(batch, tb),)

    param_bytes = (w1.size * w1.dtype.itemsize
                   + w2.size * w2.dtype.itemsize
                   + pvec.size * pvec.dtype.itemsize)
    cost = pl.CostEstimate(
        flops=2 * batch * (N_INPUT * N_H1 + N_H1 * N_H2 + N_H2 * N_OUT),
        transcendentals=batch,  # sigmoid
        bytes_accessed=batch * N_INPUT * x.dtype.itemsize
        + batch * N_OUT * 4
        + param_bytes,
    )

    out = pl.pallas_call(
        clf_kernel,
        out_shape=jax.ShapeDtypeStruct((N_OUT, batch), jnp.float32),
        grid=grid,
        in_specs=[
            pl.BlockSpec((tb, N_INPUT), lambda i: (i, 0)),       # x tile (pipelined)
            pl.BlockSpec((N_H1, N_INPUT), lambda i: (0, 0)),     # w1 resident
            pl.BlockSpec((N_H2, N_H1), lambda i: (0, 0)),        # w2 resident
            pl.BlockSpec((_PVEC_ROWS, 1), lambda i: (0, 0)),     # packed b1/b2/w3/b3
        ],
        out_specs=pl.BlockSpec((N_OUT, tb), lambda i: (0, i)),   # lane-dense output
        compiler_params=pltpu.CompilerParams(
            dimension_semantics=("parallel",),   # shard batch tiles across TCs (v7x)
            vmem_limit_bytes=vmem_limit_bytes,
        ),
        cost_estimate=cost,
    )(x, w1, w2, pvec)

    # (1, B) -> (B, 1): same data order, so this is a free reshape (no transpose).
    return jnp.reshape(out, (batch, N_OUT))


def clf_forward(x, prepared, *, max_tile=None, vmem_limit_bytes=None):
    """x: (B, 40) float32 or bfloat16. prepared: output of prepare_params()."""
    d_tile, d_vmem = _default_tuning()
    return _clf_forward(x, prepared,
                        max_tile if max_tile is not None else d_tile,
                        vmem_limit_bytes if vmem_limit_bytes is not None else d_vmem)


def init_params(key):
    """Deterministic init mirroring nn.Linear shapes (PyTorch convention:
    weight (out, in), bias (out,))."""
    k = jax.random.split(key, 6)

    def u(key, shape, fan_in):
        bound = 1.0 / jnp.sqrt(fan_in)
        return jax.random.uniform(key, shape, jnp.float32, -bound, bound)

    return {
        "w1": u(k[0], (N_H1, N_INPUT), N_INPUT),
        "b1": u(k[1], (N_H1,), N_INPUT),
        "w2": u(k[2], (N_H2, N_H1), N_H1),
        "b2": u(k[3], (N_H2,), N_H1),
        "w3": u(k[4], (N_OUT, N_H2), N_H2),
        "b3": u(k[5], (N_OUT,), N_H2),
    }


def reference_forward(x, p):
    h1 = jnp.maximum(x @ p["w1"].T + p["b1"], 0.0)
    h2 = jnp.maximum(h1 @ p["w2"].T + p["b2"], 0.0)
    return jax.nn.sigmoid(h2 @ p["w3"].T + p["b3"])


if __name__ == "__main__":
    key = jax.random.PRNGKey(0)
    kx, kp = jax.random.split(key)
    B = 8
    x = jax.random.normal(kx, (B, N_INPUT), jnp.float32)
    params = init_params(kp)

    prepared = prepare_params(params)            # one-time weight prep (f32 stream)
    out = jax.block_until_ready(clf_forward(x, prepared))
    ref = reference_forward(x, params)
    assert out.shape == (B, N_OUT), out.shape
    assert jnp.allclose(out, ref, atol=1e-5, rtol=1e-5)

    # Multi-tile + ragged last tile path (grid > 1, masked tail, no padding).
    B2 = 300
    x2 = jax.random.normal(jax.random.PRNGKey(1), (B2, N_INPUT), jnp.float32)
    out2 = jax.block_until_ready(clf_forward(x2, prepared))
    assert out2.shape == (B2, N_OUT)
    assert jnp.allclose(out2, reference_forward(x2, params), atol=1e-5, rtol=1e-5)

    # bf16 activation/weight stream (halves HBM traffic; f32 accumulate).
    prepared_bf16 = prepare_params(params, dtype=jnp.bfloat16)
    x_bf16 = x.astype(jnp.bfloat16)              # producer-side cast
    out_bf16 = jax.block_until_ready(clf_forward(x_bf16, prepared_bf16))
    assert out_bf16.shape == (B, N_OUT)
    assert jnp.allclose(out_bf16, ref, atol=3e-2, rtol=3e-2)

    print("KERNEL_OK")
</pallas_src>

<mosaic_0001>
module attributes {stable_mosaic.version = 11 : i64} {
  func.func @clf_kernel(%arg0: i32, %arg1: memref<8x40xf32, #tpu.memory_space<vmem>>, %arg2: memref<30x40xf32, #tpu.memory_space<vmem>>, %arg3: memref<10x30xf32, #tpu.memory_space<vmem>>, %arg4: memref<72x1xf32, #tpu.memory_space<vmem>>, %arg5: memref<1x8xf32, #tpu.memory_space<vmem>>) attributes {dimension_semantics = [#tpu.dimension_semantics<parallel>], iteration_bounds = array<i64: 1>, scalar_prefetch = 0 : i64, scratch_operands = 0 : i64, tpu.core_type = #tpu.core_type<tc>, window_params = [{transform_indices = @transform_0, window_bounds = array<i64: 8, 40>}, {pipeline_mode = #tpu.pipeline_mode<synchronous>, transform_indices = @transform_1, window_bounds = array<i64: 30, 40>}, {pipeline_mode = #tpu.pipeline_mode<synchronous>, transform_indices = @transform_2, window_bounds = array<i64: 10, 30>}, {pipeline_mode = #tpu.pipeline_mode<synchronous>, transform_indices = @transform_3, window_bounds = array<i64: 72, 1>}, {transform_indices = @transform_4, window_bounds = array<i64: 1, 8>}]} {
    %c0 = arith.constant 0 : index
    %c0_0 = arith.constant 0 : index
    %0 = vector.load %arg1[%c0, %c0_0] : memref<8x40xf32, #tpu.memory_space<vmem>>, vector<8x40xf32>
    %c0_1 = arith.constant 0 : index
    %c0_2 = arith.constant 0 : index
    %1 = vector.load %arg2[%c0_1, %c0_2] : memref<30x40xf32, #tpu.memory_space<vmem>>, vector<30x40xf32>
    %cst = arith.constant dense<0.000000e+00> : vector<30x8xf32>
    %2 = tpu.matmul %1, %0, %cst {dimension_numbers = #tpu.dot_dimension_numbers<[1], [1], [0], [0], [0, 0, 1, 0], [], []>} : vector<30x40xf32>, vector<8x40xf32>, vector<30x8xf32> -> vector<30x8xf32>
    %c0_3 = arith.constant 0 : index
    %c0_4 = arith.constant 0 : index
    %3 = vector.load %arg4[%c0_3, %c0_4] : memref<72x1xf32, #tpu.memory_space<vmem>>, vector<30x1xf32>
    %4 = vector.broadcast %3 : vector<30x1xf32> to vector<30x8xf32>
    %5 = arith.addf %2, %4 : vector<30x8xf32>
    %cst_5 = arith.constant 0.000000e+00 : f32
    %6 = vector.broadcast %cst_5 : f32 to vector<30x8xf32>
    %7 = arith.maximumf %5, %6 : vector<30x8xf32>
    %c0_6 = arith.constant 0 : index
    %c0_7 = arith.constant 0 : index
    %8 = vector.load %arg3[%c0_6, %c0_7] : memref<10x30xf32, #tpu.memory_space<vmem>>, vector<10x30xf32>
    %cst_8 = arith.constant dense<0.000000e+00> : vector<10x8xf32>
    %9 = tpu.matmul %8, %7, %cst_8 {dimension_numbers = #tpu.dot_dimension_numbers<[1], [0], [0], [1], [0, 0, 1, 1], [], []>} : vector<10x30xf32>, vector<30x8xf32>, vector<10x8xf32> -> vector<10x8xf32>
    %c32 = arith.constant 32 : index
    %c0_9 = arith.constant 0 : index
    %10 = vector.load %arg4[%c32, %c0_9] : memref<72x1xf32, #tpu.memory_space<vmem>>, vector<10x1xf32>
    %11 = vector.broadcast %10 : vector<10x1xf32> to vector<10x8xf32>
    %12 = arith.addf %9, %11 : vector<10x8xf32>
    %cst_10 = arith.constant 0.000000e+00 : f32
    %13 = vector.broadcast %cst_10 : f32 to vector<10x8xf32>
    %14 = arith.maximumf %12, %13 : vector<10x8xf32>
    %c48 = arith.constant 48 : index
    %c0_11 = arith.constant 0 : index
    %15 = vector.load %arg4[%c48, %c0_11] : memref<72x1xf32, #tpu.memory_space<vmem>>, vector<10x1xf32>
    %c64 = arith.constant 64 : index
    %c0_12 = arith.constant 0 : index
    %16 = vector.load %arg4[%c64, %c0_12] : memref<72x1xf32, #tpu.memory_space<vmem>>, vector<1x1xf32>
    %17 = vector.broadcast %15 : vector<10x1xf32> to vector<10x8xf32>
    %18 = arith.mulf %17, %14 : vector<10x8xf32>
    %cst_13 = arith.constant dense<0.000000e+00> : vector<8xf32>
    %19 = vector.multi_reduction <add>, %18, %cst_13 [0] : vector<10x8xf32> to vector<8xf32>
    %20 = vector.shape_cast %19 : vector<8xf32> to vector<1x8xf32>
    %21 = vector.broadcast %16 : vector<1x1xf32> to vector<1x8xf32>
    %22 = arith.addf %20, %21 : vector<1x8xf32>
    %23 = arith.negf %22 : vector<1x8xf32>
    %24 = math.exp %23 : vector<1x8xf32>
    %cst_14 = arith.constant 1.000000e+00 : f32
    %25 = vector.broadcast %cst_14 : f32 to vector<1x8xf32>
    %26 = arith.addf %25, %24 : vector<1x8xf32>
    %27 = arith.divf %25, %26 : vector<1x8xf32>
    %c0_15 = arith.constant 0 : index
    %c0_16 = arith.constant 0 : index
    %28 = vector.load %arg5[%c0_15, %c0_16] : memref<1x8xf32, #tpu.memory_space<vmem>>, vector<1x8xf32>
    tpu.vector_store %arg5[%c0_15, %c0_16], %27 {strides = array<i32>} : memref<1x8xf32, #tpu.memory_space<vmem>>, vector<1x8xf32>,
    return
  }
  func.func @transform_0(%arg0: i32) -> (i32, i32) {
    %c0_i32 = arith.constant 0 : i32
    %c0_i32_0 = arith.constant 0 : i32
    return %arg0, %c0_i32 : i32, i32
  }
  func.func @transform_1(%arg0: i32) -> (i32, i32) {
    %c0_i32 = arith.constant 0 : i32
    %c0_i32_0 = arith.constant 0 : i32
    %c0_i32_1 = arith.constant 0 : i32
    return %c0_i32, %c0_i32_0 : i32, i32
  }
  func.func @transform_2(%arg0: i32) -> (i32, i32) {
    %c0_i32 = arith.constant 0 : i32
    %c0_i32_0 = arith.constant 0 : i32
    %c0_i32_1 = arith.constant 0 : i32
    return %c0_i32, %c0_i32_0 : i32, i32
  }
  func.func @transform_3(%arg0: i32) -> (i32, i32) {
    %c0_i32 = arith.constant 0 : i32
    %c0_i32_0 = arith.constant 0 : i32
    %c0_i32_1 = arith.constant 0 : i32
    return %c0_i32, %c0_i32_0 : i32, i32
  }
  func.func @transform_4(%arg0: i32) -> (i32, i32) {
    %c0_i32 = arith.constant 0 : i32
    %c0_i32_0 = arith.constant 0 : i32
    return %c0_i32, %arg0 : i32, i32
  }
}

</mosaic_0001>

<llo_original>
// kernel: _clf_forward.1
$region0: #{_clf_forward.1}
  #allocation0 [shape = 'u32[]', space=smem, size = 0x4, offset = 0x4, fixed_abs, tag = 'smem constant byte address 0x4 - core index']
  #allocation1 [shape = 'u32[144,128]{1,0:T(1,128)}', space=vmem, size = 0x12000, scoped, tag = 'internal scratch']
  %s0 = inlined_call_operand.vmem [shape: f32[8,40], index: 0, kind: input, shape index: {}]
  %s1 = inlined_call_operand.vmem [shape: f32[30,40], index: 1, kind: input, shape index: {}]
  %s2 = inlined_call_operand.vmem [shape: f32[10,30], index: 2, kind: input, shape index: {}]
  %s3 = inlined_call_operand.vmem [shape: f32[72,1], index: 3, kind: input, shape index: {}]
  %s4 = inlined_call_operand.hbm [shape: f32[1,8], index: 4, kind: output, shape index: {}]
  %s5 = sld [smem:[#allocation0]]
  $region26: #{_clf_forward.1} parent=0
    _
  %s7 = ssub.s32 1, %s5
  %s8 = scalar_select 0, %s7, %s5
  $region1: #{_clf_forward.1} parent=0
    #allocation2 [shape = 'u8[512]{0}', space=vmem, size = 0x400, scoped, tag = 'output window, operand 0, single buffered']
    #allocation3 [shape = 's32[1]{0}', space=sflag, size = 0x4, scoped, tag = 'scoped memory for _clf_forward.1']
    %9 = vsyncpa [#allocation3], 0
    // Predicated region
    $region2: #{_clf_forward.1} parent=1 // pred_check
      _
    $region3: #{_clf_forward.1} parent=1 // pred_check_branch
      %11 = sbr.rel (0) target = $region5
    $region4: #{_clf_forward.1} parent=1 // pred_region
      _
    $region5: #{_clf_forward.1} parent=1 // pred_fallthru
      _
    // Predicated region
    $region6: #{_clf_forward.1} parent=1 // pred_check
      _
    $region7: #{_clf_forward.1} parent=1 // pred_check_branch
      %13 = sbr.rel (0) target = $region9
    $region8: #{_clf_forward.1} parent=1 // pred_region
      _
    $region9: #{_clf_forward.1} parent=1 // pred_fallthru
      _
    // Predicated region
    $region10: #{_clf_forward.1} parent=1 // pred_check
      _
    $region11: #{_clf_forward.1} parent=1 // pred_check_branch
      %15 = sbr.rel (0) target = $region13
    $region12: #{_clf_forward.1} parent=1 // pred_region
      _
    $region13: #{_clf_forward.1} parent=1 // pred_fallthru
      _
    // Predicated region
    $region14: #{_clf_forward.1} parent=1 // pred_check
      _
    $region15: #{_clf_forward.1} parent=1 // pred_check_branch
      %17 = sbr.rel (0) target = $region17
    $region16: #{_clf_forward.1} parent=1 // pred_region
      _
    $region17: #{_clf_forward.1} parent=1 // pred_fallthru
      _
    %v18 = vld [vmem:[%s0] sm:$0xff]
    %v19 = vld [vmem:[%s1] sm:$0xff]
    %v20 = vld [vmem:[%s1 + $0x8] sm:$0xff]
    %v21 = vld [vmem:[%s1 + $0x10] sm:$0xff]
    %v22 = vld [vmem:[%s1 + $0x18] sm:$0x3f]
    %v23 = vld [vmem:[%s3] sm:$0xff]
    %v24 = vld [vmem:[%s3 + $0x8] sm:$0xff]
    %v25 = vld [vmem:[%s3 + $0x10] sm:$0xff]
    %v26 = vld [vmem:[%s3 + $0x18] sm:$0x3f]
    %28 = vset.pattern.permute.xlu0 0
    %29 = vperm.xlu0 %28, %v23
    %v30 = vpop.permute.xlu0 %29
    %33 = vset.pattern.permute.xlu0 0
    %34 = vperm.xlu0 %33, %v24
    %v35 = vpop.permute.xlu0 %34
    %38 = vset.pattern.permute.xlu0 0
    %39 = vperm.xlu0 %38, %v25
    %v40 = vpop.permute.xlu0 %39
    %43 = vset.pattern.permute.xlu0 0
    %44 = vperm.xlu0 %43, %v26
    %v45 = vpop.permute.xlu0 %44
    %vm47 = vcmask 326656
    %v49 = vsel %vm47, %v19, 0
    %v52 = vsel %vm47, %v20, 0
    %v55 = vsel %vm47, %v21, 0
    %v58 = vsel %vm47, %v22, 0
    %v61 = vsel %vm47, %v18, 0
    %63 = vmatprep.subr.mxu0 0.0
    %64 = vmatpush1.xpose.msra.mxu0 %v61
    %65 = vmatprep.subr.mxu0 0.0
    %66 = vmatpush1.xpose.msra.mxu0 0.0
    %67 = vmatprep.subr.mxu0 0.0
    %68 = vmatpush1.xpose.msra.mxu0 0.0
    %69 = vmatprep.subr.mxu0 0.0
    %70 = vmatpush1.xpose.msra.mxu0 0.0
    %71 = vmatprep.subr.mxu0 0.0
    %72 = vmatpush1.xpose.msra.mxu0 0.0
    %73 = vmatprep.subr.mxu0 0.0
    %74 = vmatpush1.xpose.msra.mxu0 0.0
    %75 = vmatprep.subr.mxu0 0.0
    %76 = vmatpush1.xpose.msra.mxu0 0.0
    %77 = vmatprep.subr.mxu0 0.0
    %78 = vmatpush1.xpose.msra.mxu0 0.0
    %79 = vmatprep.subr.mxu0 0.0
    %80 = vmatpush1.xpose.msra.mxu0 0.0
    %81 = vmatprep.subr.mxu0 0.0
    %82 = vmatpush1.xpose.msra.mxu0 0.0
    %83 = vmatprep.subr.mxu0 0.0
    %84 = vmatpush1.xpose.msra.mxu0 0.0
    %85 = vmatprep.subr.mxu0 0.0
    %86 = vmatpush1.xpose.msra.mxu0 0.0
    %87 = vmatprep.subr.mxu0 0.0
    %88 = vmatpush1.xpose.msra.mxu0 0.0
    %89 = vmatprep.subr.mxu0 0.0
    %90 = vmatpush1.xpose.msra.mxu0 0.0
    %91 = vmatprep.subr.mxu0 0.0
    %92 = vmatpush1.xpose.msra.mxu0 0.0
    %93 = vmatprep.subr.mxu0 0.0
    %94 = vmatpush1.xpose.msra.mxu0 0.0
    %95 = vmatprep.subr.mxu0 0.0
    %96 = vmatpush1.xpose.msra.mxu0 0.0
    %97 = vmatprep.subr.mxu0 0.0
    %98 = vmatpush1.xpose.msra.mxu0 0.0
    %99 = vmatprep.subr.mxu0 0.0
    %100 = vmatpush1.xpose.msra.mxu0 0.0
    %101 = vmatprep.subr.mxu0 0.0
    %102 = vmatpush1.xpose.msra.mxu0 0.0
    %103 = vmatprep.subr.mxu0 0.0
    %104 = vmatpush1.xpose.msra.mxu0 0.0
    %105 = vmatprep.subr.mxu0 0.0
    %106 = vmatpush1.xpose.msra.mxu0 0.0
    %107 = vmatprep.subr.mxu0 0.0
    %108 = vmatpush1.xpose.msra.mxu0 0.0
    %109 = vmatprep.subr.mxu0 0.0
    %110 = vmatpush1.xpose.msra.mxu0 0.0
    %111 = vmatprep.subr.mxu0 0.0
    %112 = vmatpush1.xpose.msra.mxu0 0.0
    %113 = vmatprep.subr.mxu0 0.0
    %114 = vmatpush1.xpose.msra.mxu0 0.0
    %115 = vmatprep.subr.mxu0 0.0
    %116 = vmatpush1.xpose.msra.mxu0 0.0
    %117 = vmatprep.subr.mxu0 0.0
    %118 = vmatpush1.xpose.msra.mxu0 0.0
    %119 = vmatprep.subr.mxu0 0.0
    %120 = vmatpush1.xpose.msra.mxu0 0.0
    %121 = vmatprep.subr.mxu0 0.0
    %122 = vmatpush1.xpose.msra.mxu0 0.0
    %123 = vmatprep.subr.mxu0 0.0
    %124 = vmatpush1.xpose.msra.mxu0 0.0
    %125 = vmatprep.subr.mxu0 0.0
    %126 = vmatpush1.xpose.msra.mxu0 0.0
    %127 = vmatprep.mubr.f32.mxu0 0.0
    %128 = vmatmul.mubr.f32.gmra.mrb[0].mxu0 %v49
    %v129 = vpop.f32.mrb[0].mxu0
    %v130 = vadd.f32 %v30, %v129
    %v131 = vpop.f32.mrb[0].mxu0
    %132 = vmatprep.mubr.f32.mxu0 0.0
    %133 = vmatmul.mubr.f32.gmra.mrb[0].mxu0 %v52
    %v134 = vpop.f32.mrb[0].mxu0
    %v135 = vadd.f32 %v35, %v134
    %v136 = vpop.f32.mrb[0].mxu0
    %137 = vmatprep.mubr.f32.mxu0 0.0
    %138 = vmatmul.mubr.f32.gmra.mrb[0].mxu0 %v55
    %v139 = vpop.f32.mrb[0].mxu0
    %v140 = vadd.f32 %v40, %v139
    %v141 = vpop.f32.mrb[0].mxu0
    %142 = vmatprep.mubr.f32.mxu0 0.0
    %143 = vmatmul.mubr.f32.gmra.mrb[0].mxu0 %v58
    %v144 = vpop.f32.mrb[0].mxu0
    %v145 = vadd.f32 %v45, %v144
    %v146 = vpop.f32.mrb[0].mxu0
    %147 = vdwg.mxu0
    %v148 = vmax.f32 %v130, 0.0
    %v149 = vmax.f32 %v135, 0.0
    %v150 = vmax.f32 %v140, 0.0
    %v151 = vmax.f32 %v145, 0.0
    %v152 = vld [vmem:[%s2] sm:$0xff]
    %v153 = vld [vmem:[%s2 + $0x8] sm:$0x3]
    %v154 = vld [vmem:[%s3 + $0x20] sm:$0xff]
    %v155 = vld [vmem:[%s3 + $0x28] sm:$0x3]
    %157 = vset.pattern.permute.xlu0 0
    %158 = vperm.xlu0 %157, %v154
    %v159 = vpop.permute.xlu0 %158
    %162 = vset.pattern.permute.xlu0 0
    %163 = vperm.xlu0 %162, %v155
    %v164 = vpop.permute.xlu0 %163
    %vm166 = vcmask 244736
    %v168 = vsel %vm166, %v152, 0
    %v171 = vsel %vm166, %v153, 0
    %vm173 = vcmask 1045504
    %v175 = vsel %vm173, %v151, 0
    %177 = vmatprep.subr.mxu0 0.0
    %178 = vmatpush1.msra.mxu0 %v148
    %179 = vmatprep.subr.mxu0 0.0
    %180 = vmatpush1.msra.mxu0 %v149
    %181 = vmatprep.subr.mxu0 0.0
    %182 = vmatpush1.msra.mxu0 %v150
    %183 = vmatprep.subr.mxu0 0.0
    %184 = vmatpush1.msra.mxu0 %v175
    %185 = vmatprep.subr.mxu0 0.0
    %186 = vmatpush1.msra.mxu0 0.0
    %187 = vmatprep.subr.mxu0 0.0
    %188 = vmatpush1.msra.mxu0 0.0
    %189 = vmatprep.subr.mxu0 0.0
    %190 = vmatpush1.msra.mxu0 0.0
    %191 = vmatprep.subr.mxu0 0.0
    %192 = vmatpush1.msra.mxu0 0.0
    %193 = vmatprep.subr.mxu0 0.0
    %194 = vmatpush1.msra.mxu0 0.0
    %195 = vmatprep.subr.mxu0 0.0
    %196 = vmatpush1.msra.mxu0 0.0
    %197 = vmatprep.subr.mxu0 0.0
    %198 = vmatpush1.msra.mxu0 0.0
    %199 = vmatprep.subr.mxu0 0.0
    %200 = vmatpush1.msra.mxu0 0.0
    %201 = vmatprep.subr.mxu0 0.0
    %202 = vmatpush1.msra.mxu0 0.0
    %203 = vmatprep.subr.mxu0 0.0
    %204 = vmatpush1.msra.mxu0 0.0
    %205 = vmatprep.subr.mxu0 0.0
    %206 = vmatpush1.msra.mxu0 0.0
    %207 = vmatprep.subr.mxu0 0.0
    %208 = vmatpush1.msra.mxu0 0.0
    %209 = vmatprep.subr.mxu0 0.0
    %210 = vmatpush1.msra.mxu0 0.0
    %211 = vmatprep.subr.mxu0 0.0
    %212 = vmatpush1.msra.mxu0 0.0
    %213 = vmatprep.subr.mxu0 0.0
    %214 = vmatpush1.msra.mxu0 0.0
    %215 = vmatprep.subr.mxu0 0.0
    %216 = vmatpush1.msra.mxu0 0.0
    %217 = vmatprep.subr.mxu0 0.0
    %218 = vmatpush1.msra.mxu0 0.0
    %219 = vmatprep.subr.mxu0 0.0
    %220 = vmatpush1.msra.mxu0 0.0
    %221 = vmatprep.subr.mxu0 0.0
    %222 = vmatpush1.msra.mxu0 0.0
    %223 = vmatprep.subr.mxu0 0.0
    %224 = vmatpush1.msra.mxu0 0.0
    %225 = vmatprep.subr.mxu0 0.0
    %226 = vmatpush1.msra.mxu0 0.0
    %227 = vmatprep.subr.mxu0 0.0
    %228 = vmatpush1.msra.mxu0 0.0
    %229 = vmatprep.subr.mxu0 0.0
    %230 = vmatpush1.msra.mxu0 0.0
    %231 = vmatprep.subr.mxu0 0.0
    %232 = vmatpush1.msra.mxu0 0.0
    %233 = vmatprep.subr.mxu0 0.0
    %234 = vmatpush1.msra.mxu0 0.0
    %235 = vmatprep.subr.mxu0 0.0
    %236 = vmatpush1.msra.mxu0 0.0
    %237 = vmatprep.subr.mxu0 0.0
    %238 = vmatpush1.msra.mxu0 0.0
    %239 = vmatprep.subr.mxu0 0.0
    %240 = vmatpush1.msra.mxu0 0.0
    %241 = vmatprep.mubr.f32.mxu0 0.0
    %242 = vmatmul.mubr.f32.gmra.mrb[0].mxu0 %v168
    %v243 = vpop.f32.mrb[0].mxu0
    %v244 = vadd.f32 %v159, %v243
    %v245 = vpop.f32.mrb[0].mxu0
    %246 = vmatprep.mubr.f32.mxu0 0.0
    %247 = vmatmul.mubr.f32.gmra.mrb[0].mxu0 %v171
    %v248 = vpop.f32.mrb[0].mxu0
    %v249 = vadd.f32 %v164, %v248
    %v250 = vpop.f32.mrb[0].mxu0
    %251 = vdwg.mxu0
    %v252 = vmax.f32 %v244, 0.0
    %v253 = vmax.f32 %v249, 0.0
    %v254 = vld [vmem:[%s3 + $0x30] sm:$0xff]
    %v255 = vld [vmem:[%s3 + $0x38] sm:$0x3]
    %v256 = vld [vmem:[%s3 + $0x40] sm:$0x1]
    %258 = vset.pattern.permute.xlu0 0
    %259 = vperm.xlu0 %258, %v254
    %v260 = vpop.permute.xlu0 %259
    %263 = vset.pattern.permute.xlu0 0
    %264 = vperm.xlu0 %263, %v255
    %v265 = vpop.permute.xlu0 %264
    %v267 = vmul.f32 %v260, %v252
    %v268 = vmul.f32 %v265, %v253
    %vm269 = vcmask 64512
    %v270 = vsel %vm269, %v267, 0.0
    %vm271 = vcmask 58368
    %v272 = vsel %vm271, %v268, 0.0
    %v273 = vadd.f32 %v270, %v272
    %v274 = vrot.slane %v273, 4
    %v275 = vadd.f32 %v273, %v274
    %v276 = vrot.slane %v275, 2
    %v277 = vadd.f32 %v275, %v276
    %v278 = vrot.slane %v277, 1
    %v279 = vadd.f32 %v277, %v278
    %281 = vset.pattern.permute.xlu0 0
    %282 = vperm.xlu0 %281, %v256
    %v283 = vpop.permute.xlu0 %282
    %v285 = vadd.f32 %v279, %v283
    %v286 = vxor.u32 %v285, 2147483648
    %v287 = vmul.f32 %v286, 1.442695
    %v288 = vpow.pop %v287
    %v289 = vadd.f32 %v288, 1.0
    %v290 = vrcp.pop %v289
    %v291 = vmul.f32 1.0, %v290
    %vm292 = vcmask 57344
    %293 = vst.msk [vmem:[#allocation2] sm:$0x1] %vm292, %v291
    // Predicated region
    $region18: #{_clf_forward.1} parent=1 // pred_check
      _
    $region19: #{_clf_forward.1} parent=1 // pred_check_branch
      %295 = sbr.rel (0) target = $region21
    $region20: #{_clf_forward.1} parent=1 // pred_region
      %s297 = ssub.s32 16, 16
      %298 = vsyncadd [#allocation3], %s297
      %s300 = sshll.u32 [#allocation2], 4
      %s301 = int_to_ptr.vmem [resolvable:$true] %s300
      %303 = dma.vmem_to_hbm [thread:$0]  %s301, 16, %s4, [#allocation3]
    $region21: #{_clf_forward.1} parent=1 // pred_fallthru
      _
    // Predicated region
    $region22: #{_clf_forward.1} parent=1 // pred_check
      _
    $region23: #{_clf_forward.1} parent=1 // pred_check_branch
      %305 = sbr.rel (0) target = $region25
    $region24: #{_clf_forward.1} parent=1 // pred_region
      %306 = dma.done [#allocation3], 16
    $region25: #{_clf_forward.1} parent=1 // pred_fallthru
      _
    %307 = vsyncpa [#allocation3], 1

</llo_original>
